<compile_context>
chip_gen: v7x
topology: tpu7x:2x2x1
jax: 0.10.0
libtpu: 0.0.40
codegen_flags: <defaults>
</compile_context>

<pallas_src>
import jax
import jax.numpy as jnp
from jax.experimental import pallas as pl
from jax.experimental.pallas import tpu as pltpu


# Conservative per-call VMEM budget / limit that fits every generation:
# v5e/v6e have 128 MiB physical (16/32 MiB scoped default), v7x has 64 MiB physical per TC.
_DEFAULT_VMEM_BUDGET = 40 * 1024 * 1024
_VMEM_LIMIT_BYTES = 48 * 1024 * 1024


def _dsize(dtype):
    return jnp.dtype(dtype).itemsize


def _pick_row_tile(n_rows, per_row_bytes, fixed_bytes, budget_bytes, prefer_multi_step):
    """Pick a row tile T for an (n_rows, ...) tiled output.

    T is a multiple of 8 that divides n_rows (sublane aligned, no output padding), or
    n_rows itself (a full-extent block is always legal).  Returns (T, n_rows_padded);
    n_rows_padded != n_rows only in a degenerate fallback (huge, awkwardly sized n_rows).
    """
    budget_rows = max(8, (budget_bytes - fixed_bytes) // max(per_row_bytes, 1))
    cands = []
    if n_rows <= budget_rows:
        cands.append(n_rows)
    t = 8
    limit = min(n_rows, budget_rows)
    while t <= limit:
        if n_rows % t == 0:
            cands.append(t)
        t += 8
    if not cands:
        # Degenerate fallback: pad rows to a multiple of the largest budget-fitting tile.
        t = max(8, (budget_rows // 8) * 8)
        return t, ((n_rows + t - 1) // t) * t
    if prefer_multi_step and n_rows >= 16:
        multi = [c for c in cands if c <= n_rows // 2]
        if multi:
            return max(multi), n_rows
    return max(cands), n_rows


def _broadcast_copy_kernel(tab_ref, out_ref):
    # Fast path (position_ids = None): output rows are exactly table[0:S, :].
    # tab_ref : VMEM (1, S*D) [lane-dense] or (S, D); out_ref : (Bt, S*D) or (Bt, S, D).
    out_ref[...] = jnp.broadcast_to(tab_ref[...], out_ref.shape)


def _onehot_gather_kernel(pos_ref, table_ref, out_ref):
    # pos_ref   : VMEM int32 [Tp, G]  — G consecutive flattened position ids per packed row
    # table_ref : VMEM       [L, D]   — full embedding table, resident (single-buffered)
    # out_ref   : VMEM       [Tp, G*D] — lane-dense packed output tile
    Tp, G = pos_ref.shape
    L, D = table_ref.shape
    # MXU dtype: float tables stay as-is (one-hot matmul is exact); anything else (e.g. an
    # int8-quantized table) is promoted to f32 — v7x's MXU has no integer path.
    if jnp.issubdtype(table_ref.dtype, jnp.floating):
        mm_dtype = table_ref.dtype
    else:
        mm_dtype = jnp.float32
    tab = table_ref[...].astype(mm_dtype)
    col = jax.lax.broadcasted_iota(jnp.int32, (Tp, L), 1)      # hoisted out of the g-loop
    pieces = []
    for g in range(G):                                         # static unroll, G = 128 // D (or 1)
        # Clamp: dynamic VMEM indexing/gather has no runtime bounds check on TPU.
        pos_g = jnp.clip(pos_ref[:, g:g + 1], 0, L - 1)        # [Tp, 1]
        onehot = (col == pos_g).astype(mm_dtype)               # [Tp, L]
        pieces.append(
            jnp.dot(onehot, tab, preferred_element_type=jnp.float32)  # one MXU pass -> [Tp, D]
        )
    res = pieces[0] if G == 1 else jnp.concatenate(pieces, axis=-1)   # [Tp, G*D]
    out_ref[...] = res.astype(out_ref.dtype)


def positional_embedding(table, input_ids, position_ids=None, *,
                         vmem_budget_bytes=_DEFAULT_VMEM_BUDGET):
    """table: [max_seq_length, d_model]; input_ids: [B, S] (shape only) -> [B, S, d_model]."""
    table = jnp.asarray(table)
    B, S = input_ids.shape
    L, D = table.shape
    dtype = table.dtype
    dsz = _dsize(dtype)

    # ------------------- fast path: position_ids is None (arange positions) -------------------
    if position_ids is None:
        if S > L:
            # Matches the PyTorch module's error (statically known here).
            raise ValueError(f"position_ids exceden max_seq_length ({L}).")
        table_s = table[:S, :]
        out_bytes = B * S * D * dsz
        cost = pl.CostEstimate(flops=0, transcendentals=0,
                               bytes_accessed=out_bytes + S * D * dsz)
        cparams = pltpu.CompilerParams(dimension_semantics=("parallel",),
                                       vmem_limit_bytes=_VMEM_LIMIT_BYTES)
        if (S * D) % 128 == 0:
            # Lane-dense slab: table[0:S] flattened to (1, S*D), output (B, S*D) -> unmasked vst.
            tab_in = table_s.reshape(1, S * D)
            bt, b_pad = _pick_row_tile(
                B, per_row_bytes=2 * S * D * dsz, fixed_bytes=2 * S * D * dsz,
                budget_bytes=vmem_budget_bytes,
                prefer_multi_step=(out_bytes >= (1 << 20)))
            if b_pad == B:   # normal case: no batch padding needed
                out2d = pl.pallas_call(
                    _broadcast_copy_kernel,
                    out_shape=jax.ShapeDtypeStruct((B, S * D), dtype),
                    grid=(B // bt,),
                    in_specs=[pl.BlockSpec((1, S * D), lambda b: (0, 0))],
                    out_specs=pl.BlockSpec((bt, S * D), lambda b: (b, 0)),
                    compiler_params=cparams,
                    cost_estimate=cost,
                )(tab_in)
                return out2d.reshape(B, S, D)
        # Fallback (lane packing not possible): batch-tiled (Bt, S, D) broadcast copy.
        bt = B
        while bt > 1 and 2 * bt * S * D * dsz + 2 * S * D * dsz > vmem_budget_bytes:
            bt -= 1
            while bt > 1 and B % bt != 0:
                bt -= 1
        return pl.pallas_call(
            _broadcast_copy_kernel,
            out_shape=jax.ShapeDtypeStruct((B, S, D), dtype),
            grid=(B // bt,),
            in_specs=[pl.BlockSpec((S, D), lambda b: (0, 0))],
            out_specs=pl.BlockSpec((bt, S, D), lambda b: (b, 0, 0)),
            compiler_params=cparams,
            cost_estimate=cost,
        )(table_s)

    # ------------------- general path: explicit position_ids (one-hot MXU gather) -------------
    position_ids = jnp.asarray(position_ids, dtype=jnp.int32)
    N = B * S

    # Lane packing: group G = 128 // D consecutive output rows into one 128-lane packed row
    # so stores are unmasked; only when D < 128 divides 128 and G divides N.
    if D < 128 and 128 % D == 0 and N % (128 // D) == 0:
        G = 128 // D
    else:
        G = 1
    Np = N // G
    W = G * D

    table_bytes = L * D * dsz
    per_row = (2 * W * dsz      # double-buffered output tile rows
               + 2 * G * 4      # double-buffered position rows
               + G * L * 8      # in-kernel iota + one-hot intermediates
               + G * D * 4)     # f32 matmul result rows
    prefer_multi = (Np >= 16) and (N * D * dsz >= (1 << 20))
    Tp, Np_pad = _pick_row_tile(Np, per_row, table_bytes, vmem_budget_bytes, prefer_multi)

    pos_pk = position_ids.reshape(N).reshape(Np, G)
    if Np_pad != Np:
        # Degenerate fallback only (see _pick_row_tile); padded rows are sliced off below.
        pos_pk = jnp.pad(pos_pk, ((0, Np_pad - Np), (0, 0)))

    cost = pl.CostEstimate(
        flops=2 * Np_pad * G * L * D,
        transcendentals=0,
        bytes_accessed=Np_pad * W * dsz + table_bytes + Np_pad * G * 4,
    )
    cparams = pltpu.CompilerParams(
        dimension_semantics=("parallel",),
        vmem_limit_bytes=max(_VMEM_LIMIT_BYTES, table_bytes + Tp * per_row + (4 << 20)),
    )

    def _call(table_pipeline_mode):
        spec_kwargs = {} if table_pipeline_mode is None else {"pipeline_mode": table_pipeline_mode}
        return pl.pallas_call(
            _onehot_gather_kernel,
            out_shape=jax.ShapeDtypeStruct((Np_pad, W), dtype),
            grid=(Np_pad // Tp,),
            in_specs=[
                pl.BlockSpec((Tp, G), lambda i: (i, 0)),
                # Full table resident in VMEM; constant index_map, so a single buffer is
                # enough (halves the table footprint — matters on v7x's 64 MiB VMEM).
                pl.BlockSpec((L, D), lambda i: (0, 0), **spec_kwargs),
            ],
            out_specs=pl.BlockSpec((Tp, W), lambda i: (i, 0)),
            compiler_params=cparams,
            cost_estimate=cost,
        )(pos_pk, table)

    try:
        out_pk = _call(pl.Buffered(1))
    except Exception:  # fallback for jax versions without single-buffer pipeline_mode support
        out_pk = _call(None)

    out_flat = out_pk.reshape(Np_pad * G, D)
    if Np_pad != Np:
        out_flat = out_flat[:N]
    return out_flat.reshape(B, S, D)


if __name__ == "__main__":
    # Config-equivalent small shapes
    batch_size = 2
    seq_len = 8
    d_model = 32
    max_seq_length = 64

    key = jax.random.PRNGKey(0)
    k_table, k_ids = jax.random.split(key)

    # nn.Embedding default init ~ N(0, 1)
    pos_embeds = jax.random.normal(k_table, (max_seq_length, d_model), dtype=jnp.float32)

    # input_ids only used for shape (as in the PyTorch forward)
    input_ids = jax.random.randint(k_ids, (batch_size, seq_len), 0, 100, dtype=jnp.int32)

    # Case 1: default position_ids (arange) -> lane-dense single-step broadcast-copy fast path
    out_default = jax.block_until_ready(positional_embedding(pos_embeds, input_ids))

    # Case 2: explicit (non-trivial) position_ids -> lane-packed one-hot MXU gather path
    position_ids = jax.random.randint(jax.random.PRNGKey(1), (batch_size, seq_len),
                                      0, max_seq_length, dtype=jnp.int32)
    out_explicit = jax.block_until_ready(
        positional_embedding(pos_embeds, input_ids, position_ids))

    # Case 3: force the gather path with arange positions (covers both code paths)
    arange_ids = jnp.broadcast_to(jnp.arange(seq_len, dtype=jnp.int32)[None, :],
                                  (batch_size, seq_len))
    out_arange = jax.block_until_ready(
        positional_embedding(pos_embeds, input_ids, arange_ids))

    # References (plain JAX gather)
    ref_default = jnp.take(pos_embeds, arange_ids, axis=0)
    ref_explicit = jnp.take(pos_embeds, position_ids, axis=0)

    assert out_default.shape == (batch_size, seq_len, d_model)
    assert jnp.allclose(out_default, ref_default)
    assert jnp.allclose(out_explicit, ref_explicit)
    assert jnp.allclose(out_arange, ref_default)

    print("KERNEL_OK")
</pallas_src>

<mosaic_0001>
module attributes {stable_mosaic.version = 11 : i64} {
  func.func @_broadcast_copy_kernel(%arg0: i32, %arg1: memref<1x256xf32, #tpu.memory_space<vmem>>, %arg2: memref<2x256xf32, #tpu.memory_space<vmem>>) attributes {dimension_semantics = [#tpu.dimension_semantics<parallel>], iteration_bounds = array<i64: 1>, scalar_prefetch = 0 : i64, scratch_operands = 0 : i64, tpu.core_type = #tpu.core_type<tc>, window_params = [{pipeline_mode = #tpu.pipeline_mode<synchronous>, transform_indices = @transform_0, window_bounds = array<i64: 1, 256>}, {transform_indices = @transform_1, window_bounds = array<i64: 2, 256>}]} {
    %c0 = arith.constant 0 : index
    %c0_0 = arith.constant 0 : index
    %0 = vector.load %arg1[%c0, %c0_0] : memref<1x256xf32, #tpu.memory_space<vmem>>, vector<1x256xf32>
    %1 = vector.shape_cast %0 : vector<1x256xf32> to vector<1x256xf32>
    %2 = vector.broadcast %1 : vector<1x256xf32> to vector<2x256xf32>
    %c0_1 = arith.constant 0 : index
    %c0_2 = arith.constant 0 : index
    %3 = vector.load %arg2[%c0_1, %c0_2] : memref<2x256xf32, #tpu.memory_space<vmem>>, vector<2x256xf32>
    tpu.vector_store %arg2[%c0_1, %c0_2], %2 {strides = array<i32>} : memref<2x256xf32, #tpu.memory_space<vmem>>, vector<2x256xf32>,
    return
  }
  func.func @transform_0(%arg0: i32) -> (i32, i32) {
    %c0_i32 = arith.constant 0 : i32
    %c0_i32_0 = arith.constant 0 : i32
    %c0_i32_1 = arith.constant 0 : i32
    return %c0_i32, %c0_i32_0 : i32, i32
  }
  func.func @transform_1(%arg0: i32) -> (i32, i32) {
    %c0_i32 = arith.constant 0 : i32
    %c0_i32_0 = arith.constant 0 : i32
    return %arg0, %c0_i32 : i32, i32
  }
}

</mosaic_0001>

<llo_original>
// kernel: tpu_custom_call.1
$region0: #{tpu_custom_call.1}
  #allocation0 [shape = 'u32[]', space=smem, size = 0x4, offset = 0x4, fixed_abs, tag = 'smem constant byte address 0x4 - core index']
  #allocation1 [shape = 'u32[144,128]{1,0:T(1,128)}', space=vmem, size = 0x12000, scoped, tag = 'internal scratch']
  %s0 = inlined_call_operand.hbm [shape: f32[1,256], index: 0, kind: input, shape index: {}]
  %s1 = inlined_call_operand.hbm [shape: f32[2,256], index: 1, kind: output, shape index: {}]
  %s2 = sld [smem:[#allocation0]]
  $region18: #{tpu_custom_call.1} parent=0
    _
  %s4 = ssub.s32 1, %s2
  %s5 = scalar_select 0, %s4, %s2
  $region1: #{tpu_custom_call.1} parent=0
    #allocation2 [shape = 'u8[1024]{0}', space=vmem, size = 0x400, scoped, tag = 'input window, operand 0, single buffered']
    #allocation3 [shape = 's32[1]{0}', space=sflag, size = 0x4, scoped, tag = 'scoped memory for tpu_custom_call.1']
    #allocation4 [shape = 's32[1]{0}', space=sflag, size = 0x4, scoped, tag = 'scoped memory for tpu_custom_call.1']
    #allocation5 [shape = 'u8[2048]{0}', space=vmem, size = 0x800, scoped, tag = 'output window, operand 0, single buffered']
    %6 = vsyncpa [#allocation3], 0
    %7 = vsyncpa [#allocation4], 0
    // Predicated region
    $region2: #{tpu_custom_call.1} parent=1 // pred_check
      _
    $region3: #{tpu_custom_call.1} parent=1 // pred_check_branch
      %9 = sbr.rel (0) target = $region5
    $region4: #{tpu_custom_call.1} parent=1 // pred_region
      %s11 = ssub.s32 32, 32
      %12 = vsyncadd [#allocation3], %s11
      %s14 = sshll.u32 [#allocation2], 4
      %s15 = int_to_ptr.vmem [resolvable:$true] %s14
      %17 = dma.hbm_to_vmem [thread:$0]  %s0, 32, %s15, [#allocation3]
    $region5: #{tpu_custom_call.1} parent=1 // pred_fallthru
      _
    // Predicated region
    $region6: #{tpu_custom_call.1} parent=1 // pred_check
      _
    $region7: #{tpu_custom_call.1} parent=1 // pred_check_branch
      %19 = sbr.rel (0) target = $region9
    $region8: #{tpu_custom_call.1} parent=1 // pred_region
      %20 = dma.done [#allocation3], 32
    $region9: #{tpu_custom_call.1} parent=1 // pred_fallthru
      _
    %v21 = vld [vmem:[#allocation2] sm:$0x3]
    %v23 = vlaneseq
    %v24 = vshrl.u32 %v23, 7
    %v25 = vsub.s32 0, %v24
    %v26 = vrot.slane %v21, %v25
    %v27 = vlaneseq
    %v28 = vshrl.u32 %v27, 7
    %v29 = vsub.s32 1, %v28
    %v30 = vrot.slane %v21, %v29
    %v31 = vcombine.low %v26, %v30
    %v33 = vunpack.c.l.s4 1983009808
    %v34 = vunpack.c.0.s8 %v33
    %v35 = vlaneseq
    %v36 = vshrl.u32 %v35, 7
    %v37 = vsub.s32 %v34, %v36
    %v38 = vrot.slane %v31, %v37
    %40 = vst [vmem:[#allocation5] sm:$0xf] %v38
    // Predicated region
    $region10: #{tpu_custom_call.1} parent=1 // pred_check
      _
    $region11: #{tpu_custom_call.1} parent=1 // pred_check_branch
      %42 = sbr.rel (0) target = $region13
    $region12: #{tpu_custom_call.1} parent=1 // pred_region
      %s44 = ssub.s32 64, 64
      %45 = vsyncadd [#allocation4], %s44
      %s47 = sshll.u32 [#allocation5], 4
      %s48 = int_to_ptr.vmem [resolvable:$true] %s47
      %50 = dma.vmem_to_hbm [thread:$0]  %s48, 64, %s1, [#allocation4]
    $region13: #{tpu_custom_call.1} parent=1 // pred_fallthru
      _
    // Predicated region
    $region14: #{tpu_custom_call.1} parent=1 // pred_check
      _
    $region15: #{tpu_custom_call.1} parent=1 // pred_check_branch
      %52 = sbr.rel (0) target = $region17
    $region16: #{tpu_custom_call.1} parent=1 // pred_region
      %53 = dma.done [#allocation4], 64
    $region17: #{tpu_custom_call.1} parent=1 // pred_fallthru
      _
    %54 = vsyncpa [#allocation3], 1
    %55 = vsyncpa [#allocation4], 1

</llo_original>
